<compile_context>
chip_gen: v5e
topology: v5e:2x2
jax: 0.10.0
libtpu: 0.0.40
codegen_flags: <defaults>
</compile_context>

<pallas_src>
import jax
import jax.numpy as jnp
from jax.experimental import pallas as pl
from jax.experimental.pallas import tpu as pltpu


def _mlp_kernel(x_ref,
                w1_ref, t1_ref,
                w2_ref, t2_ref,
                w3_ref, t3_ref,
                w4_ref, b4_ref,
                o_ref):
    x = x_ref[...]                                                   # bf16 [tb, F]

    # layer_1 (+ folded BN1) -> relu
    h = jnp.dot(x, w1_ref[...], preferred_element_type=jnp.float32) + t1_ref[...]
    h = jnp.maximum(h, 0.0).astype(jnp.bfloat16)

    # layer_2 (+ folded BN2) -> relu   (dropout = identity in eval)
    h = jnp.dot(h, w2_ref[...], preferred_element_type=jnp.float32) + t2_ref[...]
    h = jnp.maximum(h, 0.0).astype(jnp.bfloat16)

    # layer_3 (+ folded BN3) -> relu   (dropout = identity in eval)
    h = jnp.dot(h, w3_ref[...], preferred_element_type=jnp.float32) + t3_ref[...]
    h = jnp.maximum(h, 0.0).astype(jnp.bfloat16)

    # layer_out (zero-padded to 128 lanes)
    out = jnp.dot(h, w4_ref[...], preferred_element_type=jnp.float32) + b4_ref[...]
    o_ref[...] = out.astype(o_ref.dtype)


def multiclass_classification_forward(x, params, *, tile_b=512):
    """Fused eval-mode forward pass. x: [B, num_feature] float32.

    params: (w1, b1, s1, t1, w2, b2, s2, t2, w3, b3, s3, t3, w4, b4)
      - linear weights stored transposed as [in, out]
      - (s_i, t_i) are the folded BatchNorm scale/shift (eval mode).
    Returns [B, num_class] float32.
    """
    (w1, b1, s1, t1,
     w2, b2, s2, t2,
     w3, b3, s3, t3,
     w4, b4) = params

    B, F = x.shape
    num_class = w4.shape[1]

    # --- fold BN scale into the weight columns, BN shift + linear bias into t' ---
    w1f = (w1 * s1).astype(jnp.bfloat16)
    t1f = (b1 * s1 + t1).astype(jnp.float32)
    w2f = (w2 * s2).astype(jnp.bfloat16)
    t2f = (b2 * s2 + t2).astype(jnp.float32)
    w3f = (w3 * s3).astype(jnp.bfloat16)
    t3f = (b3 * s3 + t3).astype(jnp.float32)

    # --- pad the head to a lane-dense (multiple of 128) output width ---
    n_pad = max(128, ((num_class + 127) // 128) * 128)
    w4f = jnp.zeros((w4.shape[0], n_pad), jnp.float32).at[:, :num_class].set(w4)
    w4f = w4f.astype(jnp.bfloat16)
    b4f = jnp.zeros((1, n_pad), jnp.float32).at[:, :num_class].set(b4)

    x_bf16 = x.astype(jnp.bfloat16)

    # --- batch tiling (large tiles; pad B up to a multiple of the tile) ---
    tb = min(tile_b, B)
    B_pad = ((B + tb - 1) // tb) * tb
    if B_pad != B:
        x_bf16 = jnp.pad(x_bf16, ((0, B_pad - B), (0, 0)))

    def full_spec(arr):
        # Whole-array block, constant index map: DMA'd once, stays VMEM-resident.
        # (Deliberately NOT tiled; total weights are ~180 KB in bf16.)
        return pl.BlockSpec(arr.shape, lambda i: (0,) * arr.ndim)

    grid = (B_pad // tb,)
    out = pl.pallas_call(
        _mlp_kernel,
        out_shape=jax.ShapeDtypeStruct((B_pad, n_pad), jnp.float32),
        grid_spec=pltpu.PrefetchScalarGridSpec(
            num_scalar_prefetch=0,
            grid=grid,
            in_specs=[
                pl.BlockSpec((tb, F), lambda i: (i, 0)),
                full_spec(w1f), full_spec(t1f),
                full_spec(w2f), full_spec(t2f),
                full_spec(w3f), full_spec(t3f),
                full_spec(w4f), full_spec(b4f),
            ],
            out_specs=pl.BlockSpec((tb, n_pad), lambda i: (i, 0)),
        ),
        compiler_params=pltpu.CompilerParams(
            dimension_semantics=("parallel",),
            vmem_limit_bytes=48 * 1024 * 1024,
        ),
    )(x_bf16,
      w1f, t1f,
      w2f, t2f,
      w3f, t3f,
      w4f, b4f)

    return out[:B, :num_class]


def init_params(key, num_feature, num_class, eps=1e-5):
    """Deterministic synthetic parameters matching the PyTorch module shapes.

    Linear weights are stored transposed as [in, out]; BatchNorm
    (gamma, beta, running_mean, running_var) are folded into per-feature
    (scale, shift) for the eval-mode forward pass."""
    dims = [num_feature, 512, 128, 64, num_class]
    keys = jax.random.split(key, 32)
    ki = iter(range(32))

    def linear(fan_in, fan_out):
        bound = 1.0 / jnp.sqrt(fan_in)
        w = jax.random.uniform(keys[next(ki)], (fan_in, fan_out),
                               jnp.float32, -bound, bound)
        b = jax.random.uniform(keys[next(ki)], (1, fan_out),
                               jnp.float32, -bound, bound)
        return w, b

    def bn_fold(n):
        gamma = 1.0 + 0.1 * jax.random.normal(keys[next(ki)], (1, n), jnp.float32)
        beta = 0.1 * jax.random.normal(keys[next(ki)], (1, n), jnp.float32)
        mean = 0.1 * jax.random.normal(keys[next(ki)], (1, n), jnp.float32)
        var = jax.random.uniform(keys[next(ki)], (1, n), jnp.float32, 0.5, 1.5)
        scale = gamma / jnp.sqrt(var + eps)
        shift = beta - mean * scale
        return scale, shift

    w1, b1 = linear(dims[0], dims[1]); s1, t1 = bn_fold(dims[1])
    w2, b2 = linear(dims[1], dims[2]); s2, t2 = bn_fold(dims[2])
    w3, b3 = linear(dims[2], dims[3]); s3, t3 = bn_fold(dims[3])
    w4, b4 = linear(dims[3], dims[4])
    return (w1, b1, s1, t1, w2, b2, s2, t2, w3, b3, s3, t3, w4, b4)


def reference_forward(x, params):
    """Pure-f32 eval-mode reference (original parameterization)."""
    (w1, b1, s1, t1, w2, b2, s2, t2, w3, b3, s3, t3, w4, b4) = params
    h = jnp.maximum((x @ w1 + b1) * s1 + t1, 0.0)
    h = jnp.maximum((h @ w2 + b2) * s2 + t2, 0.0)
    h = jnp.maximum((h @ w3 + b3) * s3 + t3, 0.0)
    return h @ w4 + b4


if __name__ == "__main__":
    key = jax.random.PRNGKey(0)
    k_param, k_x = jax.random.split(key)

    num_feature = 32
    num_class = 8
    batch = 64

    params = init_params(k_param, num_feature, num_class)
    x = jax.random.normal(k_x, (batch, num_feature), jnp.float32)

    out = multiclass_classification_forward(x, params, tile_b=512)
    out = jax.block_until_ready(out)

    ref = reference_forward(x, params)
    assert out.shape == (batch, num_class)
    # bf16 MXU inputs -> tolerance loosened vs. the pure-f32 reference.
    assert jnp.allclose(out, ref, atol=5e-2, rtol=5e-2), "mismatch vs reference"

    print("KERNEL_OK")
</pallas_src>

<mosaic_0001>
module attributes {stable_mosaic.version = 11 : i64} {
  func.func @_mlp_kernel(%arg0: i32, %arg1: memref<64x32xbf16, #tpu.memory_space<vmem>>, %arg2: memref<32x512xbf16, #tpu.memory_space<vmem>>, %arg3: memref<1x512xf32, #tpu.memory_space<vmem>>, %arg4: memref<512x128xbf16, #tpu.memory_space<vmem>>, %arg5: memref<1x128xf32, #tpu.memory_space<vmem>>, %arg6: memref<128x64xbf16, #tpu.memory_space<vmem>>, %arg7: memref<1x64xf32, #tpu.memory_space<vmem>>, %arg8: memref<64x128xbf16, #tpu.memory_space<vmem>>, %arg9: memref<1x128xf32, #tpu.memory_space<vmem>>, %arg10: memref<64x128xf32, #tpu.memory_space<vmem>>) attributes {dimension_semantics = [#tpu.dimension_semantics<parallel>], iteration_bounds = array<i64: 1>, scalar_prefetch = 0 : i64, scratch_operands = 0 : i64, tpu.core_type = #tpu.core_type<tc>, window_params = [{transform_indices = @transform_0, window_bounds = array<i64: 64, 32>}, {pipeline_mode = #tpu.pipeline_mode<synchronous>, transform_indices = @transform_1, window_bounds = array<i64: 32, 512>}, {pipeline_mode = #tpu.pipeline_mode<synchronous>, transform_indices = @transform_2, window_bounds = array<i64: 1, 512>}, {pipeline_mode = #tpu.pipeline_mode<synchronous>, transform_indices = @transform_3, window_bounds = array<i64: 512, 128>}, {pipeline_mode = #tpu.pipeline_mode<synchronous>, transform_indices = @transform_4, window_bounds = array<i64: 1, 128>}, {pipeline_mode = #tpu.pipeline_mode<synchronous>, transform_indices = @transform_5, window_bounds = array<i64: 128, 64>}, {pipeline_mode = #tpu.pipeline_mode<synchronous>, transform_indices = @transform_6, window_bounds = array<i64: 1, 64>}, {pipeline_mode = #tpu.pipeline_mode<synchronous>, transform_indices = @transform_7, window_bounds = array<i64: 64, 128>}, {pipeline_mode = #tpu.pipeline_mode<synchronous>, transform_indices = @transform_8, window_bounds = array<i64: 1, 128>}, {transform_indices = @transform_9, window_bounds = array<i64: 64, 128>}]} {
    %c0 = arith.constant 0 : index
    %c0_0 = arith.constant 0 : index
    %0 = vector.load %arg1[%c0, %c0_0] : memref<64x32xbf16, #tpu.memory_space<vmem>>, vector<64x32xbf16>
    %c0_1 = arith.constant 0 : index
    %c0_2 = arith.constant 0 : index
    %1 = vector.load %arg2[%c0_1, %c0_2] : memref<32x512xbf16, #tpu.memory_space<vmem>>, vector<32x512xbf16>
    %cst = arith.constant dense<0.000000e+00> : vector<64x512xf32>
    %2 = tpu.matmul %0, %1, %cst {dimension_numbers = #tpu.dot_dimension_numbers<[1], [0], [0], [1], [0, 0, 1, 1], [], []>} : vector<64x32xbf16>, vector<32x512xbf16>, vector<64x512xf32> -> vector<64x512xf32>
    %c0_3 = arith.constant 0 : index
    %c0_4 = arith.constant 0 : index
    %3 = vector.load %arg3[%c0_3, %c0_4] : memref<1x512xf32, #tpu.memory_space<vmem>>, vector<1x512xf32>
    %4 = vector.broadcast %3 : vector<1x512xf32> to vector<64x512xf32>
    %5 = arith.addf %2, %4 : vector<64x512xf32>
    %cst_5 = arith.constant 0.000000e+00 : f32
    %6 = vector.broadcast %cst_5 : f32 to vector<64x512xf32>
    %7 = arith.maximumf %5, %6 : vector<64x512xf32>
    %8 = arith.truncf %7 : vector<64x512xf32> to vector<64x512xbf16>
    %c0_6 = arith.constant 0 : index
    %c0_7 = arith.constant 0 : index
    %9 = vector.load %arg4[%c0_6, %c0_7] : memref<512x128xbf16, #tpu.memory_space<vmem>>, vector<512x128xbf16>
    %cst_8 = arith.constant dense<0.000000e+00> : vector<64x128xf32>
    %10 = tpu.matmul %8, %9, %cst_8 {dimension_numbers = #tpu.dot_dimension_numbers<[1], [0], [0], [1], [0, 0, 1, 1], [], []>} : vector<64x512xbf16>, vector<512x128xbf16>, vector<64x128xf32> -> vector<64x128xf32>
    %c0_9 = arith.constant 0 : index
    %c0_10 = arith.constant 0 : index
    %11 = vector.load %arg5[%c0_9, %c0_10] : memref<1x128xf32, #tpu.memory_space<vmem>>, vector<1x128xf32>
    %12 = vector.broadcast %11 : vector<1x128xf32> to vector<64x128xf32>
    %13 = arith.addf %10, %12 : vector<64x128xf32>
    %cst_11 = arith.constant 0.000000e+00 : f32
    %14 = vector.broadcast %cst_11 : f32 to vector<64x128xf32>
    %15 = arith.maximumf %13, %14 : vector<64x128xf32>
    %16 = arith.truncf %15 : vector<64x128xf32> to vector<64x128xbf16>
    %c0_12 = arith.constant 0 : index
    %c0_13 = arith.constant 0 : index
    %17 = vector.load %arg6[%c0_12, %c0_13] : memref<128x64xbf16, #tpu.memory_space<vmem>>, vector<128x64xbf16>
    %cst_14 = arith.constant dense<0.000000e+00> : vector<64x64xf32>
    %18 = tpu.matmul %16, %17, %cst_14 {dimension_numbers = #tpu.dot_dimension_numbers<[1], [0], [0], [1], [0, 0, 1, 1], [], []>} : vector<64x128xbf16>, vector<128x64xbf16>, vector<64x64xf32> -> vector<64x64xf32>
    %c0_15 = arith.constant 0 : index
    %c0_16 = arith.constant 0 : index
    %19 = vector.load %arg7[%c0_15, %c0_16] : memref<1x64xf32, #tpu.memory_space<vmem>>, vector<1x64xf32>
    %20 = vector.broadcast %19 : vector<1x64xf32> to vector<64x64xf32>
    %21 = arith.addf %18, %20 : vector<64x64xf32>
    %cst_17 = arith.constant 0.000000e+00 : f32
    %22 = vector.broadcast %cst_17 : f32 to vector<64x64xf32>
    %23 = arith.maximumf %21, %22 : vector<64x64xf32>
    %24 = arith.truncf %23 : vector<64x64xf32> to vector<64x64xbf16>
    %c0_18 = arith.constant 0 : index
    %c0_19 = arith.constant 0 : index
    %25 = vector.load %arg8[%c0_18, %c0_19] : memref<64x128xbf16, #tpu.memory_space<vmem>>, vector<64x128xbf16>
    %cst_20 = arith.constant dense<0.000000e+00> : vector<64x128xf32>
    %26 = tpu.matmul %24, %25, %cst_20 {dimension_numbers = #tpu.dot_dimension_numbers<[1], [0], [0], [1], [0, 0, 1, 1], [], []>} : vector<64x64xbf16>, vector<64x128xbf16>, vector<64x128xf32> -> vector<64x128xf32>
    %c0_21 = arith.constant 0 : index
    %c0_22 = arith.constant 0 : index
    %27 = vector.load %arg9[%c0_21, %c0_22] : memref<1x128xf32, #tpu.memory_space<vmem>>, vector<1x128xf32>
    %28 = vector.broadcast %27 : vector<1x128xf32> to vector<64x128xf32>
    %29 = arith.addf %26, %28 : vector<64x128xf32>
    %c0_23 = arith.constant 0 : index
    %c0_24 = arith.constant 0 : index
    %30 = vector.load %arg10[%c0_23, %c0_24] : memref<64x128xf32, #tpu.memory_space<vmem>>, vector<64x128xf32>
    tpu.vector_store %arg10[%c0_23, %c0_24], %29 {strides = array<i32>} : memref<64x128xf32, #tpu.memory_space<vmem>>, vector<64x128xf32>,
    return
  }
  func.func @transform_0(%arg0: i32) -> (i32, i32) {
    %c0_i32 = arith.constant 0 : i32
    %c0_i32_0 = arith.constant 0 : i32
    return %arg0, %c0_i32 : i32, i32
  }
  func.func @transform_1(%arg0: i32) -> (i32, i32) {
    %c0_i32 = arith.constant 0 : i32
    %c0_i32_0 = arith.constant 0 : i32
    %c0_i32_1 = arith.constant 0 : i32
    return %c0_i32, %c0_i32_0 : i32, i32
  }
  func.func @transform_2(%arg0: i32) -> (i32, i32) {
    %c0_i32 = arith.constant 0 : i32
    %c0_i32_0 = arith.constant 0 : i32
    %c0_i32_1 = arith.constant 0 : i32
    return %c0_i32, %c0_i32_0 : i32, i32
  }
  func.func @transform_3(%arg0: i32) -> (i32, i32) {
    %c0_i32 = arith.constant 0 : i32
    %c0_i32_0 = arith.constant 0 : i32
    %c0_i32_1 = arith.constant 0 : i32
    return %c0_i32, %c0_i32_0 : i32, i32
  }
  func.func @transform_4(%arg0: i32) -> (i32, i32) {
    %c0_i32 = arith.constant 0 : i32
    %c0_i32_0 = arith.constant 0 : i32
    %c0_i32_1 = arith.constant 0 : i32
    return %c0_i32, %c0_i32_0 : i32, i32
  }
  func.func @transform_5(%arg0: i32) -> (i32, i32) {
    %c0_i32 = arith.constant 0 : i32
    %c0_i32_0 = arith.constant 0 : i32
    %c0_i32_1 = arith.constant 0 : i32
    return %c0_i32, %c0_i32_0 : i32, i32
  }
  func.func @transform_6(%arg0: i32) -> (i32, i32) {
    %c0_i32 = arith.constant 0 : i32
    %c0_i32_0 = arith.constant 0 : i32
    %c0_i32_1 = arith.constant 0 : i32
    return %c0_i32, %c0_i32_0 : i32, i32
  }
  func.func @transform_7(%arg0: i32) -> (i32, i32) {
    %c0_i32 = arith.constant 0 : i32
    %c0_i32_0 = arith.constant 0 : i32
    %c0_i32_1 = arith.constant 0 : i32
    return %c0_i32, %c0_i32_0 : i32, i32
  }
  func.func @transform_8(%arg0: i32) -> (i32, i32) {
    %c0_i32 = arith.constant 0 : i32
    %c0_i32_0 = arith.constant 0 : i32
    %c0_i32_1 = arith.constant 0 : i32
    return %c0_i32, %c0_i32_0 : i32, i32
  }
  func.func @transform_9(%arg0: i32) -> (i32, i32) {
    %c0_i32 = arith.constant 0 : i32
    %c0_i32_0 = arith.constant 0 : i32
    return %arg0, %c0_i32 : i32, i32
  }
}

</mosaic_0001>

<llo_original>
// kernel: tpu_custom_call.1
$region0: #{tpu_custom_call.1}
  #allocation0 [shape = 'u32[]', space=smem, size = 0x4, offset = 0x4, fixed_abs, tag = 'smem constant byte address 0x4 - core index']
  #allocation1 [shape = 'u32[72,128]{1,0:T(1,128)}', space=vmem, size = 0x9000, scoped, tag = 'internal scratch']
  %s0 = inlined_call_operand.vmem [shape: bf16[64,32], index: 0, kind: input, shape index: {}]
  %s1 = inlined_call_operand.vmem [shape: bf16[32,512], index: 1, kind: input, shape index: {}]
  %s2 = inlined_call_operand.vmem [shape: f32[1,512], index: 2, kind: input, shape index: {}]
  %s3 = inlined_call_operand.hbm [shape: bf16[512,128], index: 3, kind: input, shape index: {}]
  %s4 = inlined_call_operand.vmem [shape: f32[1,128], index: 4, kind: input, shape index: {}]
  %s5 = inlined_call_operand.vmem [shape: bf16[128,64], index: 5, kind: input, shape index: {}]
  %s6 = inlined_call_operand.vmem [shape: f32[1,64], index: 6, kind: input, shape index: {}]
  %s7 = inlined_call_operand.vmem [shape: bf16[64,128], index: 7, kind: input, shape index: {}]
  %s8 = inlined_call_operand.vmem [shape: f32[1,128], index: 8, kind: input, shape index: {}]
  %s9 = inlined_call_operand.hbm [shape: f32[64,128], index: 9, kind: output, shape index: {}]
  %s10 = sld [smem:[#allocation0]]
  $region50: #{tpu_custom_call.1} parent=0
    _
  %s12 = ssub.s32 1, %s10
  %s13 = scalar_select 0, %s12, %s10
  $region1: #{tpu_custom_call.1} parent=0
    #allocation2 [shape = 'u8[131072]{0}', space=vmem, size = 0x20000, scoped, tag = 'input window, operand 3, single buffered']
    #allocation3 [shape = 's32[1]{0}', space=sflag, size = 0x4, scoped, tag = 'scoped memory for tpu_custom_call.1']
    #allocation4 [shape = 's32[1]{0}', space=sflag, size = 0x4, scoped, tag = 'scoped memory for tpu_custom_call.1']
    #allocation5 [shape = 'u8[32768]{0}', space=vmem, size = 0x8000, scoped, tag = 'output window, operand 0, single buffered']
    %14 = vsyncpa [#allocation3], 0
    %15 = vsyncpa [#allocation4], 0
    // Predicated region
    $region2: #{tpu_custom_call.1} parent=1 // pred_check
      _
    $region3: #{tpu_custom_call.1} parent=1 // pred_check_branch
      %17 = sbr.rel (0) target = $region5
    $region4: #{tpu_custom_call.1} parent=1 // pred_region
      _
    $region5: #{tpu_custom_call.1} parent=1 // pred_fallthru
      _
    // Predicated region
    $region6: #{tpu_custom_call.1} parent=1 // pred_check
      _
    $region7: #{tpu_custom_call.1} parent=1 // pred_check_branch
      %19 = sbr.rel (0) target = $region9
    $region8: #{tpu_custom_call.1} parent=1 // pred_region
      _
    $region9: #{tpu_custom_call.1} parent=1 // pred_fallthru
      _
    // Predicated region
    $region10: #{tpu_custom_call.1} parent=1 // pred_check
      _
    $region11: #{tpu_custom_call.1} parent=1 // pred_check_branch
      %21 = sbr.rel (0) target = $region13
    $region12: #{tpu_custom_call.1} parent=1 // pred_region
      _
    $region13: #{tpu_custom_call.1} parent=1 // pred_fallthru
      _
    // Predicated region
    $region14: #{tpu_custom_call.1} parent=1 // pred_check
      _
    $region15: #{tpu_custom_call.1} parent=1 // pred_check_branch
      %23 = sbr.rel (0) target = $region17
    $region16: #{tpu_custom_call.1} parent=1 // pred_region
      %25 = vsyncadd [#allocation3], 0
      %s26 = sshll.u32 %s3, 4
      %s27 = int_to_ptr.hbm [resolvable:$true] %s26
      %s28 = sshll.u32 [#allocation2], 4
      %s29 = int_to_ptr.vmem [resolvable:$true] %s28
      %34 = dma.hbm_to_vmem [thread:$0]  %s27, 4096, %s29, [#allocation3], 64, 64, 4
    $region17: #{tpu_custom_call.1} parent=1 // pred_fallthru
      _
    // Predicated region
    $region18: #{tpu_custom_call.1} parent=1 // pred_check
      _
    $region19: #{tpu_custom_call.1} parent=1 // pred_check_branch
      %36 = sbr.rel (0) target = $region21
    $region20: #{tpu_custom_call.1} parent=1 // pred_region
      _
    $region21: #{tpu_custom_call.1} parent=1 // pred_fallthru
      _
    // Predicated region
    $region22: #{tpu_custom_call.1} parent=1 // pred_check
      _
    $region23: #{tpu_custom_call.1} parent=1 // pred_check_branch
      %38 = sbr.rel (0) target = $region25
    $region24: #{tpu_custom_call.1} parent=1 // pred_region
      _
    $region25: #{tpu_custom_call.1} parent=1 // pred_fallthru
      _
    // Predicated region
    $region26: #{tpu_custom_call.1} parent=1 // pred_check
      _
    $region27: #{tpu_custom_call.1} parent=1 // pred_check_branch
      %40 = sbr.rel (0) target = $region29
    $region28: #{tpu_custom_call.1} parent=1 // pred_region
      _
    $region29: #{tpu_custom_call.1} parent=1 // pred_fallthru
      _
    // Predicated region
    $region30: #{tpu_custom_call.1} parent=1 // pred_check
      _
    $region31: #{tpu_custom_call.1} parent=1 // pred_check_branch
      %42 = sbr.rel (0) target = $region33
    $region32: #{tpu_custom_call.1} parent=1 // pred_region
      _
    $region33: #{tpu_custom_call.1} parent=1 // pred_fallthru
      _
    // Predicated region
    $region34: #{tpu_custom_call.1} parent=1 // pred_check
      _
    $region35: #{tpu_custom_call.1} parent=1 // pred_check_branch
      %44 = sbr.rel (0) target = $region37
    $region36: #{tpu_custom_call.1} parent=1 // pred_region
      _
    $region37: #{tpu_custom_call.1} parent=1 // pred_fallthru
      _
    // Predicated region
    $region38: #{tpu_custom_call.1} parent=1 // pred_check
      _
    $region39: #{tpu_custom_call.1} parent=1 // pred_check_branch
      %46 = sbr.rel (0) target = $region41
    $region40: #{tpu_custom_call.1} parent=1 // pred_region
      %48 = dma.done [#allocation3], 4096
    $region41: #{tpu_custom_call.1} parent=1 // pred_fallthru
      _
    %v50 = vld [vmem:[%s0] sm:$0xf]
    %v51 = vld [vmem:[%s0 + $0x4] sm:$0xf]
    %v52 = vld [vmem:[%s0 + $0x8] sm:$0xf]
    %v53 = vld [vmem:[%s0 + $0xc] sm:$0xf]
    %v54 = vld [vmem:[%s0 + $0x10] sm:$0xf]
    %v55 = vld [vmem:[%s0 + $0x14] sm:$0xf]
    %v56 = vld [vmem:[%s0 + $0x18] sm:$0xf]
    %v57 = vld [vmem:[%s0 + $0x1c] sm:$0xf]
    %v58 = vld [vmem:[%s1] sm:$0xff]
    %v59 = vld [vmem:[%s1 + $0x8] sm:$0xff]
    %v60 = vld [vmem:[%s1 + $0x10] sm:$0xff]
    %v61 = vld [vmem:[%s1 + $0x18] sm:$0xff]
    %v62 = vld [vmem:[%s1 + $0x20] sm:$0xff]
    %v63 = vld [vmem:[%s1 + $0x28] sm:$0xff]
    %v64 = vld [vmem:[%s1 + $0x30] sm:$0xff]
    %v65 = vld [vmem:[%s1 + $0x38] sm:$0xff]
    %v66 = vld [vmem:[%s2] sm:$0xf]
    %v68 = vperm.slane %v66, 0
    %v69 = vperm.slane %v66, 1
    %v70 = vperm.slane %v66, 2
    %v71 = vperm.slane %v66, 3
    %v84 = vunpack.c.l.b16 %v50
    %v85 = vunpack.c.l.b16 %v51
    %v86 = vunpack.c.l.b16 %v52
    %v87 = vunpack.c.l.b16 %v53
    %v88 = vunpack.c.l.b16 %v54
    %v89 = vunpack.c.l.b16 %v55
    %v90 = vunpack.c.l.b16 %v56
    %v91 = vunpack.c.l.b16 %v57
    %v92 = vpack.c.b16 %v85, %v84
    %v93 = vpack.c.b16 %v87, %v86
    %v94 = vpack.c.b16 %v89, %v88
    %v95 = vpack.c.b16 %v91, %v90
    %v104 = vunpack.c.l.b16 %v58
    %v105 = vunpack.c.h.b16 %v58
    %v106 = vunpack.c.l.b16 %v59
    %v107 = vunpack.c.h.b16 %v59
    %v108 = vunpack.c.l.b16 %v60
    %v109 = vunpack.c.h.b16 %v60
    %v110 = vunpack.c.l.b16 %v61
    %v111 = vunpack.c.h.b16 %v61
    %v112 = vunpack.c.l.b16 %v62
    %v113 = vunpack.c.h.b16 %v62
    %v114 = vunpack.c.l.b16 %v63
    %v115 = vunpack.c.h.b16 %v63
    %v116 = vunpack.c.l.b16 %v64
    %v117 = vunpack.c.h.b16 %v64
    %v118 = vunpack.c.l.b16 %v65
    %v119 = vunpack.c.h.b16 %v65
    %v120 = vpack.c.b16 %v108, %v104
    %v121 = vpack.c.b16 %v109, %v105
    %v122 = vpack.c.b16 %v110, %v106
    %v123 = vpack.c.b16 %v111, %v107
    %v124 = vpack.c.b16 %v116, %v112
    %v125 = vpack.c.b16 %v117, %v113
    %v126 = vpack.c.b16 %v118, %v114
    %v127 = vpack.c.b16 %v119, %v115
    %vm136 = vcmask 261120
    %v138 = vsel %vm136, %v92, 0
    %v141 = vsel %vm136, %v93, 0
    %v144 = vsel %vm136, %v94, 0
    %v147 = vsel %vm136, %v95, 0
    %149 = vmatpush.bf16.msra.mxu0 0
    %150 = vmatpush.bf16.msra.mxu0 0
    %151 = vmatpush.bf16.msra.mxu0 0
    %152 = vmatpush.bf16.msra.mxu0 0
    %153 = vmatpush.bf16.msra.mxu0 0
    %154 = vmatpush.bf16.msra.mxu0 0
    %155 = vmatpush.bf16.msra.mxu0 %v124
    %156 = vmatpush.bf16.msra.mxu0 %v120
    %157 = vmatmul.bf16.gmra.mxu0 %v138
    %v158 = vpop.f32.mrf.mxu0
    %v159 = vadd.f32 %v68, %v158
    %v160 = vpop.f32.mrf.mxu0
    %v161 = vadd.f32 %v68, %v160
    %162 = vmatmul.bf16.gmra.mxu0 %v141
    %v163 = vpop.f32.mrf.mxu0
    %v164 = vadd.f32 %v68, %v163
    %v165 = vpop.f32.mrf.mxu0
    %v166 = vadd.f32 %v68, %v165
    %167 = vmatmul.bf16.gmra.mxu0 %v144
    %v168 = vpop.f32.mrf.mxu0
    %v169 = vadd.f32 %v68, %v168
    %v170 = vpop.f32.mrf.mxu0
    %v171 = vadd.f32 %v68, %v170
    %172 = vmatmul.bf16.gmra.mxu0 %v147
    %v173 = vpop.f32.mrf.mxu0
    %v174 = vadd.f32 %v68, %v173
    %v175 = vpop.f32.mrf.mxu0
    %v176 = vadd.f32 %v68, %v175
    %177 = vdwg.mxu0
    %178 = vmatpush.bf16.msra.mxu0 0
    %179 = vmatpush.bf16.msra.mxu0 0
    %180 = vmatpush.bf16.msra.mxu0 0
    %181 = vmatpush.bf16.msra.mxu0 0
    %182 = vmatpush.bf16.msra.mxu0 0
    %183 = vmatpush.bf16.msra.mxu0 0
    %184 = vmatpush.bf16.msra.mxu0 %v125
    %185 = vmatpush.bf16.msra.mxu0 %v121
    %186 = vmatmul.bf16.gmra.mxu0 %v138
    %v187 = vpop.f32.mrf.mxu0
    %v188 = vadd.f32 %v69, %v187
    %v189 = vpop.f32.mrf.mxu0
    %v190 = vadd.f32 %v69, %v189
    %191 = vmatmul.bf16.gmra.mxu0 %v141
    %v192 = vpop.f32.mrf.mxu0
    %v193 = vadd.f32 %v69, %v192
    %v194 = vpop.f32.mrf.mxu0
    %v195 = vadd.f32 %v69, %v194
    %196 = vmatmul.bf16.gmra.mxu0 %v144
    %v197 = vpop.f32.mrf.mxu0
    %v198 = vadd.f32 %v69, %v197
    %v199 = vpop.f32.mrf.mxu0
    %v200 = vadd.f32 %v69, %v199
    %201 = vmatmul.bf16.gmra.mxu0 %v147
    %v202 = vpop.f32.mrf.mxu0
    %v203 = vadd.f32 %v69, %v202
    %v204 = vpop.f32.mrf.mxu0
    %v205 = vadd.f32 %v69, %v204
    %206 = vdwg.mxu0
    %207 = vmatpush.bf16.msra.mxu0 0
    %208 = vmatpush.bf16.msra.mxu0 0
    %209 = vmatpush.bf16.msra.mxu0 0
    %210 = vmatpush.bf16.msra.mxu0 0
    %211 = vmatpush.bf16.msra.mxu0 0
    %212 = vmatpush.bf16.msra.mxu0 0
    %213 = vmatpush.bf16.msra.mxu0 %v126
    %214 = vmatpush.bf16.msra.mxu0 %v122
    %215 = vmatmul.bf16.gmra.mxu0 %v138
    %v216 = vpop.f32.mrf.mxu0
    %v217 = vadd.f32 %v70, %v216
    %v218 = vpop.f32.mrf.mxu0
    %v219 = vadd.f32 %v70, %v218
    %220 = vmatmul.bf16.gmra.mxu0 %v141
    %v221 = vpop.f32.mrf.mxu0
    %v222 = vadd.f32 %v70, %v221
    %v223 = vpop.f32.mrf.mxu0
    %v224 = vadd.f32 %v70, %v223
    %225 = vmatmul.bf16.gmra.mxu0 %v144
    %v226 = vpop.f32.mrf.mxu0
    %v227 = vadd.f32 %v70, %v226
    %v228 = vpop.f32.mrf.mxu0
    %v229 = vadd.f32 %v70, %v228
    %230 = vmatmul.bf16.gmra.mxu0 %v147
    %v231 = vpop.f32.mrf.mxu0
    %v232 = vadd.f32 %v70, %v231
    %v233 = vpop.f32.mrf.mxu0
    %v234 = vadd.f32 %v70, %v233
    %235 = vdwg.mxu0
    %236 = vmatpush.bf16.msra.mxu0 0
    %237 = vmatpush.bf16.msra.mxu0 0
    %238 = vmatpush.bf16.msra.mxu0 0
    %239 = vmatpush.bf16.msra.mxu0 0
    %240 = vmatpush.bf16.msra.mxu0 0
    %241 = vmatpush.bf16.msra.mxu0 0
    %242 = vmatpush.bf16.msra.mxu0 %v127
    %243 = vmatpush.bf16.msra.mxu0 %v123
    %244 = vmatmul.bf16.gmra.mxu0 %v138
    %v245 = vpop.f32.mrf.mxu0
    %v246 = vadd.f32 %v71, %v245
    %v247 = vpop.f32.mrf.mxu0
    %v248 = vadd.f32 %v71, %v247
    %249 = vmatmul.bf16.gmra.mxu0 %v141
    %v250 = vpop.f32.mrf.mxu0
    %v251 = vadd.f32 %v71, %v250
    %v252 = vpop.f32.mrf.mxu0
    %v253 = vadd.f32 %v71, %v252
    %254 = vmatmul.bf16.gmra.mxu0 %v144
    %v255 = vpop.f32.mrf.mxu0
    %v256 = vadd.f32 %v71, %v255
    %v257 = vpop.f32.mrf.mxu0
    %v258 = vadd.f32 %v71, %v257
    %259 = vmatmul.bf16.gmra.mxu0 %v147
    %v260 = vpop.f32.mrf.mxu0
    %v261 = vadd.f32 %v71, %v260
    %v262 = vpop.f32.mrf.mxu0
    %v263 = vadd.f32 %v71, %v262
    %264 = vdwg.mxu0
    %v265 = vmax.f32 %v159, 0.0
    %v266 = vmax.f32 %v188, 0.0
    %v267 = vmax.f32 %v217, 0.0
    %v268 = vmax.f32 %v246, 0.0
    %v269 = vmax.f32 %v161, 0.0
    %v270 = vmax.f32 %v190, 0.0
    %v271 = vmax.f32 %v219, 0.0
    %v272 = vmax.f32 %v248, 0.0
    %v273 = vmax.f32 %v164, 0.0
    %v274 = vmax.f32 %v193, 0.0
    %v275 = vmax.f32 %v222, 0.0
    %v276 = vmax.f32 %v251, 0.0
    %v277 = vmax.f32 %v166, 0.0
    %v278 = vmax.f32 %v195, 0.0
    %v279 = vmax.f32 %v224, 0.0
    %v280 = vmax.f32 %v253, 0.0
    %v281 = vmax.f32 %v169, 0.0
    %v282 = vmax.f32 %v198, 0.0
    %v283 = vmax.f32 %v227, 0.0
    %v284 = vmax.f32 %v256, 0.0
    %v285 = vmax.f32 %v171, 0.0
    %v286 = vmax.f32 %v200, 0.0
    %v287 = vmax.f32 %v229, 0.0
    %v288 = vmax.f32 %v258, 0.0
    %v289 = vmax.f32 %v174, 0.0
    %v290 = vmax.f32 %v203, 0.0
    %v291 = vmax.f32 %v232, 0.0
    %v292 = vmax.f32 %v261, 0.0
    %v293 = vmax.f32 %v176, 0.0
    %v294 = vmax.f32 %v205, 0.0
    %v295 = vmax.f32 %v234, 0.0
    %v296 = vmax.f32 %v263, 0.0
    %v297 = vpack.c.bf16 %v269, %v265
    %v298 = vpack.c.bf16 %v270, %v266
    %v299 = vpack.c.bf16 %v271, %v267
    %v300 = vpack.c.bf16 %v272, %v268
    %v301 = vpack.c.bf16 %v277, %v273
    %v302 = vpack.c.bf16 %v278, %v274
    %v303 = vpack.c.bf16 %v279, %v275
    %v304 = vpack.c.bf16 %v280, %v276
    %v305 = vpack.c.bf16 %v285, %v281
    %v306 = vpack.c.bf16 %v286, %v282
    %v307 = vpack.c.bf16 %v287, %v283
    %v308 = vpack.c.bf16 %v288, %v284
    %v309 = vpack.c.bf16 %v293, %v289
    %v310 = vpack.c.bf16 %v294, %v290
    %v311 = vpack.c.bf16 %v295, %v291
    %v312 = vpack.c.bf16 %v296, %v292
    %v313 = vld [vmem:[#allocation2] sm:$0xf]
    %v314 = vld [vmem:[#allocation2 + $0x4] sm:$0xf]
    %v315 = vld [vmem:[#allocation2 + $0x8] sm:$0xf]
    %v316 = vld [vmem:[#allocation2 + $0xc] sm:$0xf]
    %v317 = vld [vmem:[#allocation2 + $0x10] sm:$0xf]
    %v318 = vld [vmem:[#allocation2 + $0x14] sm:$0xf]
    %v319 = vld [vmem:[#allocation2 + $0x18] sm:$0xf]
    %v320 = vld [vmem:[#allocation2 + $0x1c] sm:$0xf]
    %v321 = vld [vmem:[#allocation2 + $0x20] sm:$0xf]
    %v322 = vld [vmem:[#allocation2 + $0x24] sm:$0xf]
    %v323 = vld [vmem:[#allocation2 + $0x28] sm:$0xf]
    %v324 = vld [vmem:[#allocation2 + $0x2c] sm:$0xf]
    %v325 = vld [vmem:[#allocation2 + $0x30] sm:$0xf]
    %v326 = vld [vmem:[#allocation2 + $0x34] sm:$0xf]
    %v327 = vld [vmem:[#allocation2 + $0x38] sm:$0xf]
    %v328 = vld [vmem:[#allocation2 + $0x3c] sm:$0xf]
    %v329 = vld [vmem:[#allocation2 + $0x40] sm:$0xf]
    %v330 = vld [vmem:[#allocation2 + $0x44] sm:$0xf]
    %v331 = vld [vmem:[#allocation2 + $0x48] sm:$0xf]
    %v332 = vld [vmem:[#allocation2 + $0x4c] sm:$0xf]
    %v333 = vld [vmem:[#allocation2 + $0x50] sm:$0xf]
    %v334 = vld [vmem:[#allocation2 + $0x54] sm:$0xf]
    %v335 = vld [vmem:[#allocation2 + $0x58] sm:$0xf]
    %v336 = vld [vmem:[#allocation2 + $0x5c] sm:$0xf]
    %v337 = vld [vmem:[#allocation2 + $0x60] sm:$0xf]
    %v338 = vld [vmem:[#allocation2 + $0x64] sm:$0xf]
    %v339 = vld [vmem:[#allocation2 + $0x68] sm:$0xf]
    %v340 = vld [vmem:[#allocation2 + $0x6c] sm:$0xf]
    %v341 = vld [vmem:[#allocation2 + $0x70] sm:$0xf]
    %v342 = vld [vmem:[#allocation2 + $0x74] sm:$0xf]
    %v343 = vld [vmem:[#allocation2 + $0x78] sm:$0xf]
    %v344 = vld [vmem:[#allocation2 + $0x7c] sm:$0xf]
    %v345 = vld [vmem:[#allocation2 + $0x80] sm:$0xf]
    %v346 = vld [vmem:[#allocation2 + $0x84] sm:$0xf]
    %v347 = vld [vmem:[#allocation2 + $0x88] sm:$0xf]
    %v348 = vld [vmem:[#allocation2 + $0x8c] sm:$0xf]
    %v349 = vld [vmem:[#allocation2 + $0x90] sm:$0xf]
    %v350 = vld [vmem:[#allocation2 + $0x94] sm:$0xf]
    %v351 = vld [vmem:[#allocation2 + $0x98] sm:$0xf]
    %v352 = vld [vmem:[#allocation2 + $0x9c] sm:$0xf]
    %v353 = vld [vmem:[#allocation2 + $0xa0] sm:$0xf]
    %v354 = vld [vmem:[#allocation2 + $0xa4] sm:$0xf]
    %v355 = vld [vmem:[#allocation2 + $0xa8] sm:$0xf]
    %v356 = vld [vmem:[#allocation2 + $0xac] sm:$0xf]
    %v357 = vld [vmem:[#allocation2 + $0xb0] sm:$0xf]
    %v358 = vld [vmem:[#allocation2 + $0xb4] sm:$0xf]
    %v359 = vld [vmem:[#allocation2 + $0xb8] sm:$0xf]
    %v360 = vld [vmem:[#allocation2 + $0xbc] sm:$0xf]
    %v361 = vld [vmem:[#allocation2 + $0xc0] sm:$0xf]
    %v362 = vld [vmem:[#allocation2 + $0xc4] sm:$0xf]
    %v363 = vld [vmem:[#allocation2 + $0xc8] sm:$0xf]
    %v364 = vld [vmem:[#allocation2 + $0xcc] sm:$0xf]
    %v365 = vld [vmem:[#allocation2 + $0xd0] sm:$0xf]
    %v366 = vld [vmem:[#allocation2 + $0xd4] sm:$0xf]
    %v367 = vld [vmem:[#allocation2 + $0xd8] sm:$0xf]
    %v368 = vld [vmem:[#allocation2 + $0xdc] sm:$0xf]
    %v369 = vld [vmem:[#allocation2 + $0xe0] sm:$0xf]
    %v370 = vld [vmem:[#allocation2 + $0xe4] sm:$0xf]
    %v371 = vld [vmem:[#allocation2 + $0xe8] sm:$0xf]
    %v372 = vld [vmem:[#allocation2 + $0xec] sm:$0xf]
    %v373 = vld [vmem:[#allocation2 + $0xf0] sm:$0xf]
    %v374 = vld [vmem:[#allocation2 + $0xf4] sm:$0xf]
    %v375 = vld [vmem:[#allocation2 + $0xf8] sm:$0xf]
    %v376 = vld [vmem:[#allocation2 + $0xfc] sm:$0xf]
    %v377 = vld [vmem:[%s4] sm:$0x1]
    %v379 = vperm.slane %v377, 0
    %v445 = vunpack.c.l.b16 %v313
    %v446 = vunpack.c.l.b16 %v314
    %v447 = vunpack.c.l.b16 %v315
    %v448 = vunpack.c.l.b16 %v316
    %v449 = vunpack.c.l.b16 %v317
    %v450 = vunpack.c.l.b16 %v318
    %v451 = vunpack.c.l.b16 %v319
    %v452 = vunpack.c.l.b16 %v320
    %v453 = vunpack.c.l.b16 %v321
    %v454 = vunpack.c.l.b16 %v322
    %v455 = vunpack.c.l.b16 %v323
    %v456 = vunpack.c.l.b16 %v324
    %v457 = vunpack.c.l.b16 %v325
    %v458 = vunpack.c.l.b16 %v326
    %v459 = vunpack.c.l.b16 %v327
    %v460 = vunpack.c.l.b16 %v328
    %v461 = vunpack.c.l.b16 %v329
    %v462 = vunpack.c.l.b16 %v330
    %v463 = vunpack.c.l.b16 %v331
    %v464 = vunpack.c.l.b16 %v332
    %v465 = vunpack.c.l.b16 %v333
    %v466 = vunpack.c.l.b16 %v334
    %v467 = vunpack.c.l.b16 %v335
    %v468 = vunpack.c.l.b16 %v336
    %v469 = vunpack.c.l.b16 %v337
    %v470 = vunpack.c.l.b16 %v338
    %v471 = vunpack.c.l.b16 %v339
    %v472 = vunpack.c.l.b16 %v340
    %v473 = vunpack.c.l.b16 %v341
    %v474 = vunpack.c.l.b16 %v342
    %v475 = vunpack.c.l.b16 %v343
    %v476 = vunpack.c.l.b16 %v344
    %v477 = vunpack.c.l.b16 %v345
    %v478 = vunpack.c.l.b16 %v346
    %v479 = vunpack.c.l.b16 %v347
    %v480 = vunpack.c.l.b16 %v348
    %v481 = vunpack.c.l.b16 %v349
    %v482 = vunpack.c.l.b16 %v350
    %v483 = vunpack.c.l.b16 %v351
    %v484 = vunpack.c.l.b16 %v352
    %v485 = vunpack.c.l.b16 %v353
    %v486 = vunpack.c.l.b16 %v354
    %v487 = vunpack.c.l.b16 %v355
    %v488 = vunpack.c.l.b16 %v356
    %v489 = vunpack.c.l.b16 %v357
    %v490 = vunpack.c.l.b16 %v358
    %v491 = vunpack.c.l.b16 %v359
    %v492 = vunpack.c.l.b16 %v360
    %v493 = vunpack.c.l.b16 %v361
    %v494 = vunpack.c.l.b16 %v362
    %v495 = vunpack.c.l.b16 %v363
    %v496 = vunpack.c.l.b16 %v364
    %v497 = vunpack.c.l.b16 %v365
    %v498 = vunpack.c.l.b16 %v366
    %v499 = vunpack.c.l.b16 %v367
    %v500 = vunpack.c.l.b16 %v368
    %v501 = vunpack.c.l.b16 %v369
    %v502 = vunpack.c.l.b16 %v370
    %v503 = vunpack.c.l.b16 %v371
    %v504 = vunpack.c.l.b16 %v372
    %v505 = vunpack.c.l.b16 %v373
    %v506 = vunpack.c.l.b16 %v374
    %v507 = vunpack.c.l.b16 %v375
    %v508 = vunpack.c.l.b16 %v376
    %v509 = vpack.c.b16 %v446, %v445
    %v510 = vpack.c.b16 %v448, %v447
    %v511 = vpack.c.b16 %v450, %v449
    %v512 = vpack.c.b16 %v452, %v451
    %v513 = vpack.c.b16 %v454, %v453
    %v514 = vpack.c.b16 %v456, %v455
    %v515 = vpack.c.b16 %v458, %v457
    %v516 = vpack.c.b16 %v460, %v459
    %v517 = vpack.c.b16 %v462, %v461
    %v518 = vpack.c.b16 %v464, %v463
    %v519 = vpack.c.b16 %v466, %v465
    %v520 = vpack.c.b16 %v468, %v467
    %v521 = vpack.c.b16 %v470, %v469
    %v522 = vpack.c.b16 %v472, %v471
    %v523 = vpack.c.b16 %v474, %v473
    %v524 = vpack.c.b16 %v476, %v475
    %v525 = vpack.c.b16 %v478, %v477
    %v526 = vpack.c.b16 %v480, %v479
    %v527 = vpack.c.b16 %v482, %v481
    %v528 = vpack.c.b16 %v484, %v483
    %v529 = vpack.c.b16 %v486, %v485
    %v530 = vpack.c.b16 %v488, %v487
    %v531 = vpack.c.b16 %v490, %v489
    %v532 = vpack.c.b16 %v492, %v491
    %v533 = vpack.c.b16 %v494, %v493
    %v534 = vpack.c.b16 %v496, %v495
    %v535 = vpack.c.b16 %v498, %v497
    %v536 = vpack.c.b16 %v500, %v499
    %v537 = vpack.c.b16 %v502, %v501
    %v538 = vpack.c.b16 %v504, %v503
    %v539 = vpack.c.b16 %v506, %v505
    %v540 = vpack.c.b16 %v508, %v507
    %573 = vmatpush.bf16.msra.mxu0 %v516
    %574 = vmatpush.bf16.msra.mxu0 %v515
    %575 = vmatpush.bf16.msra.mxu0 %v514
    %576 = vmatpush.bf16.msra.mxu0 %v513
    %577 = vmatpush.bf16.msra.mxu0 %v512
    %578 = vmatpush.bf16.msra.mxu0 %v511
    %579 = vmatpush.bf16.msra.mxu0 %v510
    %580 = vmatpush.bf16.msra.mxu0 %v509
    %581 = vmatmul.bf16.gmra.mxu0 %v297
    %v582 = vpop.f32.mrf.mxu0
    %v583 = vadd.f32 %v379, %v582
    %v584 = vpop.f32.mrf.mxu0
    %v585 = vadd.f32 %v379, %v584
    %586 = vmatmul.bf16.gmra.mxu0 %v301
    %v587 = vpop.f32.mrf.mxu0
    %v588 = vadd.f32 %v379, %v587
    %v589 = vpop.f32.mrf.mxu0
    %v590 = vadd.f32 %v379, %v589
    %591 = vmatmul.bf16.gmra.mxu0 %v305
    %v592 = vpop.f32.mrf.mxu0
    %v593 = vadd.f32 %v379, %v592
    %v594 = vpop.f32.mrf.mxu0
    %v595 = vadd.f32 %v379, %v594
    %596 = vmatmul.bf16.gmra.mxu0 %v309
    %v597 = vpop.f32.mrf.mxu0
    %v598 = vadd.f32 %v379, %v597
    %v599 = vpop.f32.mrf.mxu0
    %v600 = vadd.f32 %v379, %v599
    %601 = vdwg.mxu0
    %602 = vmatpush.bf16.msra.mxu0 %v524
    %603 = vmatpush.bf16.msra.mxu0 %v523
    %604 = vmatpush.bf16.msra.mxu0 %v522
    %605 = vmatpush.bf16.msra.mxu0 %v521
    %606 = vmatpush.bf16.msra.mxu0 %v520
    %607 = vmatpush.bf16.msra.mxu0 %v519
    %608 = vmatpush.bf16.msra.mxu0 %v518
    %609 = vmatpush.bf16.msra.mxu0 %v517
    %610 = vmatmul.bf16.gmra.mxu0 %v298
    %v611 = vpop.f32.mrf.mxu0
    %v612 = vadd.f32 %v583, %v611
    %v613 = vpop.f32.mrf.mxu0
    %v614 = vadd.f32 %v585, %v613
    %615 = vmatmul.bf16.gmra.mxu0 %v302
    %v616 = vpop.f32.mrf.mxu0
    %v617 = vadd.f32 %v588, %v616
    %v618 = vpop.f32.mrf.mxu0
    %v619 = vadd.f32 %v590, %v618
    %620 = vmatmul.bf16.gmra.mxu0 %v306
    %v621 = vpop.f32.mrf.mxu0
    %v622 = vadd.f32 %v593, %v621
    %v623 = vpop.f32.mrf.mxu0
    %v624 = vadd.f32 %v595, %v623
    %625 = vmatmul.bf16.gmra.mxu0 %v310
    %v626 = vpop.f32.mrf.mxu0
    %v627 = vadd.f32 %v598, %v626
    %v628 = vpop.f32.mrf.mxu0
    %v629 = vadd.f32 %v600, %v628
    %630 = vdwg.mxu0
    %631 = vmatpush.bf16.msra.mxu0 %v532
    %632 = vmatpush.bf16.msra.mxu0 %v531
    %633 = vmatpush.bf16.msra.mxu0 %v530
    %634 = vmatpush.bf16.msra.mxu0 %v529
    %635 = vmatpush.bf16.msra.mxu0 %v528
    %636 = vmatpush.bf16.msra.mxu0 %v527
    %637 = vmatpush.bf16.msra.mxu0 %v526
    %638 = vmatpush.bf16.msra.mxu0 %v525
    %639 = vmatmul.bf16.gmra.mxu0 %v299
    %v640 = vpop.f32.mrf.mxu0
    %v641 = vadd.f32 %v612, %v640
    %v642 = vpop.f32.mrf.mxu0
    %v643 = vadd.f32 %v614, %v642
    %644 = vmatmul.bf16.gmra.mxu0 %v303
    %v645 = vpop.f32.mrf.mxu0
    %v646 = vadd.f32 %v617, %v645
    %v647 = vpop.f32.mrf.mxu0
    %v648 = vadd.f32 %v619, %v647
    %649 = vmatmul.bf16.gmra.mxu0 %v307
    %v650 = vpop.f32.mrf.mxu0
    %v651 = vadd.f32 %v622, %v650
    %v652 = vpop.f32.mrf.mxu0
    %v653 = vadd.f32 %v624, %v652
    %654 = vmatmul.bf16.gmra.mxu0 %v311
    %v655 = vpop.f32.mrf.mxu0
    %v656 = vadd.f32 %v627, %v655
    %v657 = vpop.f32.mrf.mxu0
    %v658 = vadd.f32 %v629, %v657
    %659 = vdwg.mxu0
    %660 = vmatpush.bf16.msra.mxu0 %v540
    %661 = vmatpush.bf16.msra.mxu0 %v539
    %662 = vmatpush.bf16.msra.mxu0 %v538
    %663 = vmatpush.bf16.msra.mxu0 %v537
    %664 = vmatpush.bf16.msra.mxu0 %v536
    %665 = vmatpush.bf16.msra.mxu0 %v535
    %666 = vmatpush.bf16.msra.mxu0 %v534
    %667 = vmatpush.bf16.msra.mxu0 %v533
    %668 = vmatmul.bf16.gmra.mxu0 %v300
    %v669 = vpop.f32.mrf.mxu0
    %v670 = vadd.f32 %v641, %v669
    %v671 = vpop.f32.mrf.mxu0
    %v672 = vadd.f32 %v643, %v671
    %673 = vmatmul.bf16.gmra.mxu0 %v304
    %v674 = vpop.f32.mrf.mxu0
    %v675 = vadd.f32 %v646, %v674
    %v676 = vpop.f32.mrf.mxu0
    %v677 = vadd.f32 %v648, %v676
    %678 = vmatmul.bf16.gmra.mxu0 %v308
    %v679 = vpop.f32.mrf.mxu0
    %v680 = vadd.f32 %v651, %v679
    %v681 = vpop.f32.mrf.mxu0
    %v682 = vadd.f32 %v653, %v681
    %683 = vmatmul.bf16.gmra.mxu0 %v312
    %v684 = vpop.f32.mrf.mxu0
    %v685 = vadd.f32 %v656, %v684
    %v686 = vpop.f32.mrf.mxu0
    %v687 = vadd.f32 %v658, %v686
    %688 = vdwg.mxu0
    %v689 = vmax.f32 %v670, 0.0
    %v690 = vmax.f32 %v672, 0.0
    %v691 = vmax.f32 %v675, 0.0
    %v692 = vmax.f32 %v677, 0.0
    %v693 = vmax.f32 %v680, 0.0
    %v694 = vmax.f32 %v682, 0.0
    %v695 = vmax.f32 %v685, 0.0
    %v696 = vmax.f32 %v687, 0.0
    %v697 = vpack.c.bf16 %v690, %v689
    %v698 = vpack.c.bf16 %v692, %v691
    %v699 = vpack.c.bf16 %v694, %v693
    %v700 = vpack.c.bf16 %v696, %v695
    %v701 = vld [vmem:[%s5] sm:$0xf]
    %v702 = vld [vmem:[%s5 + $0x4] sm:$0xf]
    %v703 = vld [vmem:[%s5 + $0x8] sm:$0xf]
    %v704 = vld [vmem:[%s5 + $0xc] sm:$0xf]
    %v705 = vld [vmem:[%s5 + $0x10] sm:$0xf]
    %v706 = vld [vmem:[%s5 + $0x14] sm:$0xf]
    %v707 = vld [vmem:[%s5 + $0x18] sm:$0xf]
    %v708 = vld [vmem:[%s5 + $0x1c] sm:$0xf]
    %v709 = vld [vmem:[%s5 + $0x20] sm:$0xf]
    %v710 = vld [vmem:[%s5 + $0x24] sm:$0xf]
    %v711 = vld [vmem:[%s5 + $0x28] sm:$0xf]
    %v712 = vld [vmem:[%s5 + $0x2c] sm:$0xf]
    %v713 = vld [vmem:[%s5 + $0x30] sm:$0xf]
    %v714 = vld [vmem:[%s5 + $0x34] sm:$0xf]
    %v715 = vld [vmem:[%s5 + $0x38] sm:$0xf]
    %v716 = vld [vmem:[%s5 + $0x3c] sm:$0xf]
    %v717 = vld [vmem:[%s6] sm:$0x1]
    %v719 = vperm.slane %v717, 0
    %v737 = vunpack.c.l.b16 %v701
    %v738 = vunpack.c.l.b16 %v702
    %v739 = vunpack.c.l.b16 %v703
    %v740 = vunpack.c.l.b16 %v704
    %v741 = vunpack.c.l.b16 %v705
    %v742 = vunpack.c.l.b16 %v706
    %v743 = vunpack.c.l.b16 %v707
    %v744 = vunpack.c.l.b16 %v708
    %v745 = vunpack.c.l.b16 %v709
    %v746 = vunpack.c.l.b16 %v710
    %v747 = vunpack.c.l.b16 %v711
    %v748 = vunpack.c.l.b16 %v712
    %v749 = vunpack.c.l.b16 %v713
    %v750 = vunpack.c.l.b16 %v714
    %v751 = vunpack.c.l.b16 %v715
    %v752 = vunpack.c.l.b16 %v716
    %v753 = vpack.c.b16 %v738, %v737
    %v754 = vpack.c.b16 %v740, %v739
    %v755 = vpack.c.b16 %v742, %v741
    %v756 = vpack.c.b16 %v744, %v743
    %v757 = vpack.c.b16 %v746, %v745
    %v758 = vpack.c.b16 %v748, %v747
    %v759 = vpack.c.b16 %v750, %v749
    %v760 = vpack.c.b16 %v752, %v751
    %769 = vmatpush.bf16.msra.mxu0 %v760
    %770 = vmatpush.bf16.msra.mxu0 %v759
    %771 = vmatpush.bf16.msra.mxu0 %v758
    %772 = vmatpush.bf16.msra.mxu0 %v757
    %773 = vmatpush.bf16.msra.mxu0 %v756
    %774 = vmatpush.bf16.msra.mxu0 %v755
    %775 = vmatpush.bf16.msra.mxu0 %v754
    %776 = vmatpush.bf16.msra.mxu0 %v753
    %777 = vmatmul.bf16.gmra.mxu0 %v697
    %v778 = vpop.f32.mrf.mxu0
    %v779 = vadd.f32 %v719, %v778
    %v780 = vpop.f32.mrf.mxu0
    %v781 = vadd.f32 %v719, %v780
    %782 = vmatmul.bf16.gmra.mxu0 %v698
    %v783 = vpop.f32.mrf.mxu0
    %v784 = vadd.f32 %v719, %v783
    %v785 = vpop.f32.mrf.mxu0
    %v786 = vadd.f32 %v719, %v785
    %787 = vmatmul.bf16.gmra.mxu0 %v699
    %v788 = vpop.f32.mrf.mxu0
    %v789 = vadd.f32 %v719, %v788
    %v790 = vpop.f32.mrf.mxu0
    %v791 = vadd.f32 %v719, %v790
    %792 = vmatmul.bf16.gmra.mxu0 %v700
    %v793 = vpop.f32.mrf.mxu0
    %v794 = vadd.f32 %v719, %v793
    %v795 = vpop.f32.mrf.mxu0
    %v796 = vadd.f32 %v719, %v795
    %797 = vdwg.mxu0
    %v798 = vmax.f32 %v779, 0.0
    %v799 = vmax.f32 %v781, 0.0
    %v800 = vmax.f32 %v784, 0.0
    %v801 = vmax.f32 %v786, 0.0
    %v802 = vmax.f32 %v789, 0.0
    %v803 = vmax.f32 %v791, 0.0
    %v804 = vmax.f32 %v794, 0.0
    %v805 = vmax.f32 %v796, 0.0
    %v806 = vpack.c.bf16 %v799, %v798
    %v807 = vpack.c.bf16 %v801, %v800
    %v808 = vpack.c.bf16 %v803, %v802
    %v809 = vpack.c.bf16 %v805, %v804
    %v810 = vld [vmem:[%s7] sm:$0xf]
    %v811 = vld [vmem:[%s7 + $0x4] sm:$0xf]
    %v812 = vld [vmem:[%s7 + $0x8] sm:$0xf]
    %v813 = vld [vmem:[%s7 + $0xc] sm:$0xf]
    %v814 = vld [vmem:[%s7 + $0x10] sm:$0xf]
    %v815 = vld [vmem:[%s7 + $0x14] sm:$0xf]
    %v816 = vld [vmem:[%s7 + $0x18] sm:$0xf]
    %v817 = vld [vmem:[%s7 + $0x1c] sm:$0xf]
    %v818 = vld [vmem:[%s8] sm:$0x1]
    %v820 = vperm.slane %v818, 0
    %v830 = vunpack.c.l.b16 %v810
    %v831 = vunpack.c.l.b16 %v811
    %v832 = vunpack.c.l.b16 %v812
    %v833 = vunpack.c.l.b16 %v813
    %v834 = vunpack.c.l.b16 %v814
    %v835 = vunpack.c.l.b16 %v815
    %v836 = vunpack.c.l.b16 %v816
    %v837 = vunpack.c.l.b16 %v817
    %v838 = vpack.c.b16 %v831, %v830
    %v839 = vpack.c.b16 %v833, %v832
    %v840 = vpack.c.b16 %v835, %v834
    %v841 = vpack.c.b16 %v837, %v836
    %vm846 = vcmask 523264
    %v848 = vsel %vm846, %v806, 0
    %v851 = vsel %vm846, %v807, 0
    %v854 = vsel %vm846, %v808, 0
    %v857 = vsel %vm846, %v809, 0
    %859 = vmatpush.bf16.msra.mxu0 0
    %860 = vmatpush.bf16.msra.mxu0 0
    %861 = vmatpush.bf16.msra.mxu0 0
    %862 = vmatpush.bf16.msra.mxu0 0
    %863 = vmatpush.bf16.msra.mxu0 %v841
    %864 = vmatpush.bf16.msra.mxu0 %v840
    %865 = vmatpush.bf16.msra.mxu0 %v839
    %866 = vmatpush.bf16.msra.mxu0 %v838
    %867 = vmatmul.bf16.gmra.mxu0 %v848
    %v868 = vpop.f32.mrf.mxu0
    %v869 = vadd.f32 %v820, %v868
    %v870 = vpop.f32.mrf.mxu0
    %v871 = vadd.f32 %v820, %v870
    %872 = vmatmul.bf16.gmra.mxu0 %v851
    %v873 = vpop.f32.mrf.mxu0
    %v874 = vadd.f32 %v820, %v873
    %v875 = vpop.f32.mrf.mxu0
    %v876 = vadd.f32 %v820, %v875
    %877 = vmatmul.bf16.gmra.mxu0 %v854
    %v878 = vpop.f32.mrf.mxu0
    %v879 = vadd.f32 %v820, %v878
    %v880 = vpop.f32.mrf.mxu0
    %v881 = vadd.f32 %v820, %v880
    %882 = vmatmul.bf16.gmra.mxu0 %v857
    %v883 = vpop.f32.mrf.mxu0
    %v884 = vadd.f32 %v820, %v883
    %v885 = vpop.f32.mrf.mxu0
    %v886 = vadd.f32 %v820, %v885
    %887 = vdwg.mxu0
    %888 = vst [vmem:[#allocation5] sm:$0xff] %v869
    %889 = vst [vmem:[#allocation5 + $0x8] sm:$0xff] %v871
    %890 = vst [vmem:[#allocation5 + $0x10] sm:$0xff] %v874
    %891 = vst [vmem:[#allocation5 + $0x18] sm:$0xff] %v876
    %892 = vst [vmem:[#allocation5 + $0x20] sm:$0xff] %v879
    %893 = vst [vmem:[#allocation5 + $0x28] sm:$0xff] %v881
    %894 = vst [vmem:[#allocation5 + $0x30] sm:$0xff] %v884
    %895 = vst [vmem:[#allocation5 + $0x38] sm:$0xff] %v886
    // Predicated region
    $region42: #{tpu_custom_call.1} parent=1 // pred_check
      _
    $region43: #{tpu_custom_call.1} parent=1 // pred_check_branch
      %897 = sbr.rel (0) target = $region45
    $region44: #{tpu_custom_call.1} parent=1 // pred_region
      %899 = vsyncadd [#allocation4], 0
      %s900 = sshll.u32 [#allocation5], 4
      %s901 = int_to_ptr.vmem [resolvable:$true] %s900
      %s902 = sshll.u32 %s9, 4
      %s903 = int_to_ptr.hbm [resolvable:$true] %s902
      %908 = dma.vmem_to_hbm [thread:$0]  %s901, 1024, %s903, [#allocation4], 128, 128, 8
    $region45: #{tpu_custom_call.1} parent=1 // pred_fallthru
      _
    // Predicated region
    $region46: #{tpu_custom_call.1} parent=1 // pred_check
      _
    $region47: #{tpu_custom_call.1} parent=1 // pred_check_branch
      %910 = sbr.rel (0) target = $region49
    $region48: #{tpu_custom_call.1} parent=1 // pred_region
      %912 = dma.done [#allocation4], 1024
    $region49: #{tpu_custom_call.1} parent=1 // pred_fallthru
      _
    %913 = vsyncpa [#allocation3], 1
    %914 = vsyncpa [#allocation4], 1

</llo_original>
